<compile_context>
chip_gen: v6e
topology: v6e:2x2x1
jax: 0.10.0
libtpu: 0.0.40
codegen_flags: <defaults>
</compile_context>

<pallas_src>
import functools

import jax
import jax.numpy as jnp
from jax.experimental import pallas as pl
from jax.experimental.pallas import tpu as pltpu

_LANE = 128
_MAX_BLOCK_ROWS = 2048   # 2048 x 128 x 4B = 1 MiB per f32 input block
_NUM_CORE_SPLITS = 2     # shards across v7x's 2 TensorCores; no-op on 1-TC chips


def _confident_mse_kernel(x_ref, t_ref, out_ref, *, threshold, block_rows,
                          blocks_per_core, total_elems, needs_mask):
    """Accumulate sum((x - t)^2 * (t > threshold)) into an (8,128) partial-sum
    block (one partial-sum block per core split)."""
    c = pl.program_id(0)   # parallel (core-split) axis
    i = pl.program_id(1)   # sequential reduction axis

    @pl.when(i == 0)
    def _init():
        out_ref[...] = jnp.zeros_like(out_ref)

    x = x_ref[...].astype(jnp.float32)
    t = t_ref[...].astype(jnp.float32)
    d = x - t
    keep = t > jnp.float32(threshold)

    if needs_mask:
        # Mask out (a) elements past the true element count in the ragged last
        # block and (b) whole blocks re-read due to index clamping when the
        # block count does not split evenly across the core splits.
        # (Assumes total_elems < 2**31.)
        block_idx = c * blocks_per_core + i
        row = jax.lax.broadcasted_iota(jnp.int32, (block_rows, _LANE), 0)
        lane = jax.lax.broadcasted_iota(jnp.int32, (block_rows, _LANE), 1)
        elem = (block_idx * block_rows + row) * _LANE + lane
        keep = keep & (elem < total_elems)

    sq = jnp.where(keep, d * d, jnp.float32(0.0))

    if block_rows % 8 == 0:
        # VPU-only partial reduction: (block_rows, 128) -> (8, 128).
        out_ref[...] += sq.reshape(block_rows // 8, 8, _LANE).sum(axis=0)
    else:
        # Tiny-array fallback (single block covering the whole array with
        # rows % 8 != 0): reduce over sublanes, deposit into sublane 0.
        col = jnp.sum(sq, axis=0, keepdims=True)                    # (1, 128)
        row_id = jax.lax.broadcasted_iota(jnp.int32, (8, _LANE), 0)
        out_ref[...] += jnp.where(row_id == 0, col, jnp.float32(0.0))


@functools.partial(jax.jit, static_argnames=("threshold",))
def confident_mse_loss(inp, tgt, threshold=0.96):
    """Pallas implementation of ConfidentMSELoss.forward."""
    assert inp.shape == tgt.shape
    n_elems = inp.size  # denominator of the mean (true element count)

    x = inp.reshape(-1)
    t = tgt.reshape(-1)

    rows = pl.cdiv(n_elems, _LANE)
    if n_elems % _LANE != 0:
        # Rare path (NCHW activations are virtually always 128-divisible):
        # minimally pad so the lane-dense 2-D reshape is possible; padded
        # elements are masked out in-kernel via the element count.
        # TODO(synk): avoid this copy by handling the <128-element tail in JAX.
        pad = rows * _LANE - n_elems
        x = jnp.pad(x, (0, pad))
        t = jnp.pad(t, (0, pad))

    x2 = x.reshape(rows, _LANE)
    t2 = t.reshape(rows, _LANE)

    # Biggest block that fits the budget; full-array block for small inputs.
    block_rows = rows if rows <= _MAX_BLOCK_ROWS else _MAX_BLOCK_ROWS
    blocks_total = pl.cdiv(rows, block_rows)
    blocks_per_core = pl.cdiv(blocks_total, _NUM_CORE_SPLITS)
    covered = _NUM_CORE_SPLITS * blocks_per_core * block_rows * _LANE
    needs_mask = covered != n_elems

    def in_index_map(c, i):
        # Clamp so overflow steps (when blocks_total does not split evenly
        # across the core splits) re-read the last valid block; their
        # contribution is zeroed by the in-kernel element mask.
        return (jnp.minimum(c * blocks_per_core + i, blocks_total - 1), 0)

    kernel = functools.partial(
        _confident_mse_kernel,
        threshold=float(threshold),
        block_rows=block_rows,
        blocks_per_core=blocks_per_core,
        total_elems=n_elems,
        needs_mask=needs_mask,
    )

    partials = pl.pallas_call(
        kernel,
        out_shape=jax.ShapeDtypeStruct((_NUM_CORE_SPLITS * 8, _LANE), jnp.float32),
        grid_spec=pltpu.PrefetchScalarGridSpec(
            num_scalar_prefetch=0,
            grid=(_NUM_CORE_SPLITS, blocks_per_core),
            in_specs=[
                pl.BlockSpec((block_rows, _LANE), in_index_map),
                pl.BlockSpec((block_rows, _LANE), in_index_map),
            ],
            out_specs=pl.BlockSpec((8, _LANE), lambda c, i: (c, 0)),
        ),
        compiler_params=pltpu.CompilerParams(
            dimension_semantics=("parallel", "arbitrary"),
        ),
    )(x2, t2)

    # Single final cross-lane reduce + mean over the true element count.
    return jnp.sum(partials) / jnp.float32(n_elems)


def _reference_loss(inp, tgt, threshold=0.96):
    conf_mask = (tgt > threshold).astype(jnp.float32)
    diff = (inp - tgt) ** 2 * conf_mask
    return jnp.mean(diff)


if __name__ == "__main__":
    key = jax.random.PRNGKey(0)
    k1, k2 = jax.random.split(key)
    # Small NCHW shapes consistent with the UNet segmentation setting.
    x = jax.random.uniform(k1, (2, 4, 16, 16), dtype=jnp.float32)
    # targets in [0, 1] so some exceed the 0.96 confidence threshold
    y = jax.random.uniform(k2, (2, 4, 16, 16), dtype=jnp.float32)

    loss = confident_mse_loss(x, y, threshold=0.96)
    loss = jax.block_until_ready(loss)

    ref = _reference_loss(x, y, threshold=0.96)
    assert jnp.allclose(loss, ref, rtol=1e-5, atol=1e-7), (loss, ref)

    print("KERNEL_OK")
</pallas_src>

<mosaic_0001>
module attributes {stable_mosaic.version = 11 : i64} {
  func.func @_confident_mse_kernel(%arg0: i32, %arg1: i32, %arg2: memref<16x128xf32, #tpu.memory_space<vmem>>, %arg3: memref<16x128xf32, #tpu.memory_space<vmem>>, %arg4: memref<8x128xf32, #tpu.memory_space<vmem>>) attributes {dimension_semantics = [#tpu.dimension_semantics<parallel>, #tpu.dimension_semantics<arbitrary>], iteration_bounds = array<i64: 2, 1>, scalar_prefetch = 0 : i64, scratch_operands = 0 : i64, tpu.core_type = #tpu.core_type<tc>, window_params = [{transform_indices = @transform_0, window_bounds = array<i64: 16, 128>}, {transform_indices = @transform_1, window_bounds = array<i64: 16, 128>}, {transform_indices = @transform_2, window_bounds = array<i64: 8, 128>}]} {
    %c0_i32 = arith.constant 0 : i32
    %0 = arith.cmpi eq, %arg1, %c0_i32 : i32
    %1 = arith.extui %0 : i1 to i32
    %c0_i32_0 = arith.constant 0 : i32
    %2 = arith.cmpi ne, %1, %c0_i32_0 : i32
    scf.if %2 {
      %cst_10 = arith.constant 0.000000e+00 : f32
      %29 = vector.broadcast %cst_10 : f32 to vector<8x128xf32>
      %c0_11 = arith.constant 0 : index
      %c0_12 = arith.constant 0 : index
      %30 = vector.load %arg4[%c0_11, %c0_12] : memref<8x128xf32, #tpu.memory_space<vmem>>, vector<8x128xf32>
      tpu.vector_store %arg4[%c0_11, %c0_12], %29 {strides = array<i32>} : memref<8x128xf32, #tpu.memory_space<vmem>>, vector<8x128xf32>,
    } else {
    }
    %c0 = arith.constant 0 : index
    %c0_1 = arith.constant 0 : index
    %3 = vector.load %arg2[%c0, %c0_1] : memref<16x128xf32, #tpu.memory_space<vmem>>, vector<16x128xf32>
    %c0_2 = arith.constant 0 : index
    %c0_3 = arith.constant 0 : index
    %4 = vector.load %arg3[%c0_2, %c0_3] : memref<16x128xf32, #tpu.memory_space<vmem>>, vector<16x128xf32>
    %5 = arith.subf %3, %4 : vector<16x128xf32>
    %cst = arith.constant 0.959999978 : f32
    %6 = vector.broadcast %cst : f32 to vector<16x128xf32>
    %7 = arith.cmpf ogt, %4, %6 : vector<16x128xf32>
    %c1_i32 = arith.constant 1 : i32
    %8 = arith.muli %arg0, %c1_i32 : i32
    %9 = arith.addi %8, %arg1 : i32
    %10 = tpu.iota {dimensions = array<i32: 0>} : vector<16x128xi32>
    %11 = tpu.iota {dimensions = array<i32: 1>} : vector<16x128xi32>
    %c16_i32 = arith.constant 16 : i32
    %12 = arith.muli %9, %c16_i32 : i32
    %13 = vector.broadcast %12 : i32 to vector<16x128xi32>
    %14 = arith.addi %13, %10 : vector<16x128xi32>
    %c128_i32 = arith.constant 128 : i32
    %15 = vector.broadcast %c128_i32 : i32 to vector<16x128xi32>
    %16 = arith.muli %14, %15 : vector<16x128xi32>
    %17 = arith.addi %16, %11 : vector<16x128xi32>
    %c2048_i32 = arith.constant 2048 : i32
    %18 = vector.broadcast %c2048_i32 : i32 to vector<16x128xi32>
    %19 = arith.cmpi slt, %17, %18 : vector<16x128xi32>
    %20 = arith.andi %7, %19 : vector<16x128xi1>
    %21 = arith.mulf %5, %5 : vector<16x128xf32>
    %cst_4 = arith.constant 0.000000e+00 : f32
    %22 = vector.broadcast %cst_4 : f32 to vector<16x128xf32>
    %23 = arith.select %20, %21, %22 : vector<16x128xi1>, vector<16x128xf32>
    %c0_5 = arith.constant 0 : index
    %c0_6 = arith.constant 0 : index
    %24 = vector.load %arg4[%c0_5, %c0_6] : memref<8x128xf32, #tpu.memory_space<vmem>>, vector<8x128xf32>
    %25 = vector.shape_cast %23 : vector<16x128xf32> to vector<2x8x128xf32>
    %cst_7 = arith.constant dense<0.000000e+00> : vector<8x128xf32>
    %26 = vector.multi_reduction <add>, %25, %cst_7 [0] : vector<2x8x128xf32> to vector<8x128xf32>
    %27 = arith.addf %24, %26 : vector<8x128xf32>
    %c0_8 = arith.constant 0 : index
    %c0_9 = arith.constant 0 : index
    %28 = vector.load %arg4[%c0_8, %c0_9] : memref<8x128xf32, #tpu.memory_space<vmem>>, vector<8x128xf32>
    tpu.vector_store %arg4[%c0_8, %c0_9], %27 {strides = array<i32>} : memref<8x128xf32, #tpu.memory_space<vmem>>, vector<8x128xf32>,
    return
  }
  func.func @transform_0(%arg0: i32, %arg1: i32) -> (i32, i32) {
    %c1_i32 = arith.constant 1 : i32
    %0 = arith.muli %arg0, %c1_i32 : i32
    %1 = arith.addi %0, %arg1 : i32
    %c0_i32 = arith.constant 0 : i32
    %2 = arith.minsi %1, %c0_i32 : i32
    %c0_i32_0 = arith.constant 0 : i32
    %c0_i32_1 = arith.constant 0 : i32
    return %2, %c0_i32_0 : i32, i32
  }
  func.func @transform_1(%arg0: i32, %arg1: i32) -> (i32, i32) {
    %c1_i32 = arith.constant 1 : i32
    %0 = arith.muli %arg0, %c1_i32 : i32
    %1 = arith.addi %0, %arg1 : i32
    %c0_i32 = arith.constant 0 : i32
    %2 = arith.minsi %1, %c0_i32 : i32
    %c0_i32_0 = arith.constant 0 : i32
    %c0_i32_1 = arith.constant 0 : i32
    return %2, %c0_i32_0 : i32, i32
  }
  func.func @transform_2(%arg0: i32, %arg1: i32) -> (i32, i32) {
    %c0_i32 = arith.constant 0 : i32
    %c0_i32_0 = arith.constant 0 : i32
    return %arg0, %c0_i32 : i32, i32
  }
}

</mosaic_0001>

<llo_original>
// kernel: confident_mse_loss.1
$region0: #{confident_mse_loss.1}
  #allocation0 [shape = 'u32[]', space=smem, size = 0x4, offset = 0x4, fixed_abs, tag = 'smem constant byte address 0x4 - core index']
  #allocation1 [shape = 'u32[144,128]{1,0:T(1,128)}', space=vmem, size = 0x12000, scoped, tag = 'internal scratch']
  %s0 = inlined_call_operand.vmem [shape: f32[16,128], index: 0, kind: input, shape index: {}]
  %s1 = inlined_call_operand.vmem [shape: f32[16,128], index: 1, kind: input, shape index: {}]
  %s2 = inlined_call_operand.vmem [shape: f32[16,128], index: 2, kind: output, shape index: {}]
  %s3 = sld [smem:[#allocation0]]
  $region45: #{confident_mse_loss.1} parent=0
    _
  %s5 = ssub.s32 1, %s3
  %s6 = scalar_select 0, %s5, %s3
  loop: start=0, step=1, limit=4
  $region2: #{confident_mse_loss.1} parent=0 // loop_pre_header
    _
  $region3: #{confident_mse_loss.1} parent=0 // loop_header
    %s8 = sphi 0, %s12
    %p9 = scmp.ge.s32.totalorder %s8, 4
    %s15 = sphi 0, %s27
    %s16 = sphi 0, %s23
    %s17 = sphi 0, %s15
    %s18 = sphi 0, %s16
    %s19 = sphi 0, %s17
    %s20 = sphi 0, %s18
    %s36 = sphi 0, %s38
    %s39 = sphi 0, %s36
    %s40 = sphi 0, %s39
    %s56 = sphi 0, %s40
    %s68 = sphi 0, %s70
    %s71 = sphi 0, %s68
    %s72 = sphi 0, %s71
    %s88 = sphi 0, %s72
    %s94 = sphi 0, %s96
    %s97 = sphi 0, %s94
    %s98 = sphi 0, %s97
    %s114 = sphi 0, %s98
  $region4: #{confident_mse_loss.1} parent=0 // loop_header_branch
    %11 = sbr.rel (%p9) target = $region8
  $region5: #{confident_mse_loss.1} parent=0 // loop_body
    %s13 = ssub.s32 %s8, 1
    %s14 = ssub.s32 %s8, 2
    %s21 = sadd.s32 1, %s16
    %p22 = scmp.ge.s32.totalorder %s21, 1
    %s23 = scalar_select %p22, 0, %s21
    %s24 = sadd.s32 1, %s15
    %s25 = scalar_select %p22, %s24, %s15
    %p26 = scmp.ge.s32.totalorder %s25, 2
    %s27 = scalar_select %p26, 0, %s25
    %s28 = sadd.s32 %s15, %s16
    %p29 = scmp.lt.s32.totalorder %s28, 0
    %s30 = scalar_select %p29, %s28, 0
    %s31 = sadd.s32 %s27, %s23
    %p32 = scmp.lt.s32.totalorder %s31, 0
    %s33 = scalar_select %p32, %s31, 0
    %s34 = ssub.s32 %s30, %s33
    %p35 = scmp.eq.s32.totalorder %s34, 0
    %s37 = sadd.s32 %s36, 1
    %s38 = scalar_select %p35, %s36, %s37
    %p41 = pneg %p35
    %p42 = scmp.eq.s32.totalorder %s8, 1
    %p43 = por %p41, %p42
    %p44 = scmp.ne.s32.totalorder %s36, %s39
    %p45 = scmp.eq.s32.totalorder %s8, 0
    %p46 = por %p44, %p45
    %p47 = scmp.ne.s32.totalorder %s36, %s39
    %p48 = scmp.eq.s32.totalorder %s13, 1
    %p49 = por %p47, %p48
    %p50 = scmp.ne.s32.totalorder %s39, %s40
    %p51 = scmp.eq.s32.totalorder %s13, 0
    %p52 = por %p50, %p51
    %p53 = scmp.ne.s32.totalorder %s39, %s40
    %p54 = scmp.eq.s32.totalorder %s14, 1
    %p55 = por %p53, %p54
    %p57 = scmp.ne.s32.totalorder %s40, %s56
    %p58 = scmp.eq.s32.totalorder %s14, 0
    %p59 = por %p57, %p58
    %s60 = sadd.s32 %s15, %s16
    %p61 = scmp.lt.s32.totalorder %s60, 0
    %s62 = scalar_select %p61, %s60, 0
    %s63 = sadd.s32 %s27, %s23
    %p64 = scmp.lt.s32.totalorder %s63, 0
    %s65 = scalar_select %p64, %s63, 0
    %s66 = ssub.s32 %s62, %s65
    %p67 = scmp.eq.s32.totalorder %s66, 0
    %s69 = sadd.s32 %s68, 1
    %s70 = scalar_select %p67, %s68, %s69
    %p73 = pneg %p67
    %p74 = scmp.eq.s32.totalorder %s8, 1
    %p75 = por %p73, %p74
    %p76 = scmp.ne.s32.totalorder %s68, %s71
    %p77 = scmp.eq.s32.totalorder %s8, 0
    %p78 = por %p76, %p77
    %p79 = scmp.ne.s32.totalorder %s68, %s71
    %p80 = scmp.eq.s32.totalorder %s13, 1
    %p81 = por %p79, %p80
    %p82 = scmp.ne.s32.totalorder %s71, %s72
    %p83 = scmp.eq.s32.totalorder %s13, 0
    %p84 = por %p82, %p83
    %p85 = scmp.ne.s32.totalorder %s71, %s72
    %p86 = scmp.eq.s32.totalorder %s14, 1
    %p87 = por %p85, %p86
    %p89 = scmp.ne.s32.totalorder %s72, %s88
    %p90 = scmp.eq.s32.totalorder %s14, 0
    %p91 = por %p89, %p90
    %s92 = ssub.s32 %s15, %s27
    %p93 = scmp.eq.s32.totalorder %s92, 0
    %s95 = sadd.s32 %s94, 1
    %s96 = scalar_select %p93, %s94, %s95
    %p99 = pneg %p93
    %p100 = scmp.eq.s32.totalorder %s8, 1
    %p101 = por %p99, %p100
    %p102 = scmp.ne.s32.totalorder %s94, %s97
    %p103 = scmp.eq.s32.totalorder %s8, 0
    %p104 = por %p102, %p103
    %p105 = scmp.ne.s32.totalorder %s94, %s97
    %p106 = scmp.eq.s32.totalorder %s13, 1
    %p107 = por %p105, %p106
    %p108 = scmp.ne.s32.totalorder %s97, %s98
    %p109 = scmp.eq.s32.totalorder %s13, 0
    %p110 = por %p108, %p109
    %p111 = scmp.ne.s32.totalorder %s97, %s98
    %p112 = scmp.eq.s32.totalorder %s14, 1
    %p113 = por %p111, %p112
    %p115 = scmp.ne.s32.totalorder %s98, %s114
    %p116 = scmp.eq.s32.totalorder %s14, 0
    %p117 = por %p115, %p116
    %p118 = scmp.le.s32.totalorder 1, %s8
    %p119 = scmp.lt.s32.totalorder %s8, 3
    %p120 = pnand %p118, %p119
    %p121 = pneg %p120
    // Predicated region
    $region9: #{confident_mse_loss.1} parent=5 // pred_check
      _
    $region10: #{confident_mse_loss.1} parent=5 // pred_check_branch
      %123 = sbr.rel (%p120) target = $region12
    $region11: #{confident_mse_loss.1} parent=5 // pred_region
      %s124 = ssub.s32 %s8, 1
    $region12: #{confident_mse_loss.1} parent=5 // pred_fallthru
      _
    %p125 = scmp.lt.s32.totalorder %s8, 2
    // Predicated region
    $region13: #{confident_mse_loss.1} parent=5 // pred_check
      %p126 = pneg %p125
    $region14: #{confident_mse_loss.1} parent=5 // pred_check_branch
      %128 = sbr.rel (%p126) target = $region16
    $region15: #{confident_mse_loss.1} parent=5 // pred_region
      // Predicated region
      $region17: #{confident_mse_loss.1} parent=15 // pred_check
        %p129 = pneg %p46
      $region18: #{confident_mse_loss.1} parent=15 // pred_check_branch
        %131 = sbr.rel (%p129) target = $region20
      $region19: #{confident_mse_loss.1} parent=15 // pred_region
        %s132 = sadd.s32 %s15, %s16
        %p133 = scmp.lt.s32.totalorder %s132, 0
        %s134 = scalar_select %p133, %s132, 0
        %s135 = smul.u32 2, %s134
        %p136 = scmp.lt.s32.totalorder %s135, 1
        %s137 = scalar_select %p136, %s135, 1
        %s138 = smul.addr %s137, 8
        %s139 = scalar_lea.vmem %s0, %s138
        %s140 = sadd.s32 %s15, %s16
        %p141 = scmp.lt.s32.totalorder %s140, 0
        %s142 = scalar_select %p141, %s140, 0
        %s143 = smul.u32 2, %s142
      $region20: #{confident_mse_loss.1} parent=15 // pred_fallthru
        _
      // Predicated region
      $region21: #{confident_mse_loss.1} parent=15 // pred_check
        %p144 = pneg %p78
      $region22: #{confident_mse_loss.1} parent=15 // pred_check_branch
        %146 = sbr.rel (%p144) target = $region24
      $region23: #{confident_mse_loss.1} parent=15 // pred_region
        %s147 = sadd.s32 %s15, %s16
        %p148 = scmp.lt.s32.totalorder %s147, 0
        %s149 = scalar_select %p148, %s147, 0
        %s150 = smul.u32 2, %s149
        %p151 = scmp.lt.s32.totalorder %s150, 1
        %s152 = scalar_select %p151, %s150, 1
        %s153 = smul.addr %s152, 8
        %s154 = scalar_lea.vmem %s1, %s153
        %s155 = sadd.s32 %s15, %s16
        %p156 = scmp.lt.s32.totalorder %s155, 0
        %s157 = scalar_select %p156, %s155, 0
        %s158 = smul.u32 2, %s157
      $region24: #{confident_mse_loss.1} parent=15 // pred_fallthru
        _
    $region16: #{confident_mse_loss.1} parent=5 // pred_fallthru
      _
    %p159 = scmp.le.s32.totalorder 1, %s8
    %p160 = scmp.lt.s32.totalorder %s8, 3
    %p161 = pnand %p159, %p160
    %p162 = pneg %p161
    // Predicated region
    $region25: #{confident_mse_loss.1} parent=5 // pred_check
      _
    $region26: #{confident_mse_loss.1} parent=5 // pred_check_branch
      %164 = sbr.rel (%p161) target = $region28
    $region27: #{confident_mse_loss.1} parent=5 // pred_region
      %s165 = ssub.s32 %s8, 1
      %s166 = sadd.s32 %s17, %s18
      %p167 = scmp.lt.s32.totalorder %s166, 0
      %s168 = scalar_select %p167, %s166, 0
      %s169 = smul.u32 2, %s168
      %p170 = scmp.lt.s32.totalorder %s169, 1
      %s171 = scalar_select %p170, %s169, 1
      %s172 = smul.addr %s171, 8
      %s173 = scalar_lea.vmem %s0, %s172
      %p174 = pneg %p52
      %p175 = pneg %p49
      %s176 = sadd.s32 %s17, %s18
      %p177 = scmp.lt.s32.totalorder %s176, 0
      %s178 = scalar_select %p177, %s176, 0
      %s179 = smul.u32 2, %s178
      %p180 = scmp.lt.s32.totalorder %s179, 1
      %s181 = scalar_select %p180, %s179, 1
      %s182 = smul.addr %s181, 8
      %s183 = scalar_lea.vmem %s1, %s182
      %p184 = pneg %p84
      %p185 = pneg %p81
      %p186 = pneg %p110
      %p187 = pneg %p107
      %p188 = scmp.lt.s32.totalorder %s17, 1
      %s189 = scalar_select %p188, %s17, 1
      %s190 = smul.addr %s189, 8
      %s191 = scalar_lea.vmem %s2, %s190
      %s192 = sadd.s32 %s17, %s18
      %p193 = scmp.lt.s32.totalorder %s192, 0
      %s194 = scalar_select %p193, %s192, 0
      %s195 = smul.u32 2, %s194
      %p196 = scmp.lt.s32.totalorder %s195, 1
      %s197 = scalar_select %p196, %s195, 1
      %s198 = smul.addr %s197, 8
      %s199 = scalar_lea.vmem %s0, %s198
      %s200 = sadd.s32 %s17, %s18
      %p201 = scmp.lt.s32.totalorder %s200, 0
      %s202 = scalar_select %p201, %s200, 0
      %s203 = smul.u32 2, %s202
      %s204 = sadd.s32 %s17, %s18
      %p205 = scmp.lt.s32.totalorder %s204, 0
      %s206 = scalar_select %p205, %s204, 0
      %s207 = smul.u32 2, %s206
      %p208 = scmp.lt.s32.totalorder %s207, 1
      %s209 = scalar_select %p208, %s207, 1
      %s210 = smul.addr %s209, 8
      %s211 = scalar_lea.vmem %s1, %s210
      %s212 = sadd.s32 %s17, %s18
      %p213 = scmp.lt.s32.totalorder %s212, 0
      %s214 = scalar_select %p213, %s212, 0
      %s215 = smul.u32 2, %s214
      %p216 = scmp.lt.s32.totalorder %s17, 1
      %s217 = scalar_select %p216, %s17, 1
      %s218 = smul.addr %s217, 8
      %s219 = scalar_lea.vmem %s2, %s218
      %p220 = scmp.eq.s32.totalorder %s18, 0
      // Predicated region
      $region29: #{confident_mse_loss.1} parent=27 // pred_check
        %p221 = pneg %p220
      $region30: #{confident_mse_loss.1} parent=27 // pred_check_branch
        %223 = sbr.rel (%p221) target = $region32
      $region31: #{confident_mse_loss.1} parent=27 // pred_region
        %224 = vst [vmem:[%s219] sm:$0xff] 0.0
      $region32: #{confident_mse_loss.1} parent=27 // pred_fallthru
        _
      %v225 = vld [vmem:[%s199] sm:$0xff]
      %v226 = vld [vmem:[%s199 + $0x8] sm:$0xff]
      %v227 = vld [vmem:[%s211] sm:$0xff]
      %v228 = vld [vmem:[%s211 + $0x8] sm:$0xff]
      %v229 = vsub.f32 %v225, %v227
      %v230 = vsub.f32 %v226, %v228
      %vm231 = vcmp.gt.f32.partialorder %v227, 0.96
      %vm232 = vcmp.gt.f32.partialorder %v228, 0.96
      %s233 = sadd.s32 %s17, %s18
      %v234 = vlaneseq
      %v235 = vshrl.u32 %v234, 7
      %v236 = vadd.s32 %v235, 8
      %v237 = vlaneseq
      %v238 = vand.u32 %v237, 127
      %s239 = smul.u32 %s233, 16
      %v240 = vstv %s239
      %v241 = vadd.s32 %v240, %v235
      %v242 = vadd.s32 %v240, %v236
      %v243 = vmul.u32 %v241, 128
      %v244 = vmul.u32 %v242, 128
      %v245 = vadd.s32 %v243, %v238
      %v246 = vadd.s32 %v244, %v238
      %vm247 = vcmp.lt.s32.totalorder %v245, 2048
      %vm248 = vcmp.lt.s32.totalorder %v246, 2048
      %vm249 = vmand %vm231, %vm247
      %vm250 = vmand %vm232, %vm248
      %v251 = vmul.f32 %v229, %v229
      %v252 = vmul.f32 %v230, %v230
      %v253 = vsel %vm249, %v251, 0.0
      %v254 = vsel %vm250, %v252, 0.0
      %v255 = vld [vmem:[%s219] sm:$0xff]
      %v256 = vadd.f32 %v253, %v254
      %v257 = vadd.f32 %v255, %v256
      %258 = vst [vmem:[%s219] sm:$0xff] %v257
      %p259 = scmp.lt.s32.totalorder %s17, 1
      %s260 = scalar_select %p259, %s17, 1
      %s261 = smul.addr %s260, 8
      %s262 = scalar_lea.vmem %s2, %s261
      // Predicated region
      $region33: #{confident_mse_loss.1} parent=27 // pred_check
        %p263 = pneg %p107
      $region34: #{confident_mse_loss.1} parent=27 // pred_check_branch
        %265 = sbr.rel (%p263) target = $region36
      $region35: #{confident_mse_loss.1} parent=27 // pred_region
        _
      $region36: #{confident_mse_loss.1} parent=27 // pred_fallthru
        _
    $region28: #{confident_mse_loss.1} parent=5 // pred_fallthru
      _
    %p266 = scmp.le.s32.totalorder 2, %s8
    // Predicated region
    $region37: #{confident_mse_loss.1} parent=5 // pred_check
      %p267 = pneg %p266
    $region38: #{confident_mse_loss.1} parent=5 // pred_check_branch
      %269 = sbr.rel (%p267) target = $region40
    $region39: #{confident_mse_loss.1} parent=5 // pred_region
      %s270 = ssub.s32 %s8, 2
      // Predicated region
      $region41: #{confident_mse_loss.1} parent=39 // pred_check
        %p271 = pneg %p113
      $region42: #{confident_mse_loss.1} parent=39 // pred_check_branch
        %273 = sbr.rel (%p271) target = $region44
      $region43: #{confident_mse_loss.1} parent=39 // pred_region
        %p274 = scmp.lt.s32.totalorder %s19, 1
        %s275 = scalar_select %p274, %s19, 1
        %s276 = smul.addr %s275, 8
        %s277 = scalar_lea.vmem %s2, %s276
      $region44: #{confident_mse_loss.1} parent=39 // pred_fallthru
        _
    $region40: #{confident_mse_loss.1} parent=5 // pred_fallthru
      _
  $region6: #{confident_mse_loss.1} parent=0 // loop_footer
    %s12 = sadd.s32 1, %s8
  $region7: #{confident_mse_loss.1} parent=0 // loop_footer_branch
    %7 = sbr.rel target = $region3
  $region8: #{confident_mse_loss.1} parent=0 // loop_exit
    _

</llo_original>
